<compile_context>
chip_gen: v7x
topology: tpu7x:2x2x1
jax: 0.10.0
libtpu: 0.0.40
codegen_flags: <defaults>
</compile_context>

<pallas_src>
import jax
import jax.numpy as jnp
from jax.experimental import pallas as pl
from jax.experimental.pallas import tpu as pltpu

_LANES = 128
_MAX_BLOCK_BYTES = 8 << 20  # per-buffer target on v6e/v7x (review #4/#5)


# ----------------------------------------------------------------------------
# Kernel bodies
# ----------------------------------------------------------------------------
def _identity_dma_kernel(x_hbm, o_hbm, sem):
    """is_on=True: one HBM->HBM DMA of the whole array (pure DMA-engine work)."""
    cp = pltpu.make_async_copy(x_hbm, o_hbm, sem)
    cp.start()
    cp.wait()


def _zero_fill_kernel(o_ref):
    """is_on=False: write zeros; the input is never read from HBM."""
    o_ref[...] = jnp.zeros_like(o_ref)


# ----------------------------------------------------------------------------
# Sizing helpers
# ----------------------------------------------------------------------------
def _vmem_capacity_bytes() -> int:
    try:
        return int(pltpu.get_tpu_info().vmem_capacity_bytes)
    except Exception:
        return 64 << 20  # conservative fallback (v7x per-core VMEM)


def _choose_block_rows(rows: int, itemsize: int, block_bytes: int) -> int:
    """Largest lane-dense block (multiple of the dtype's sublane packing) near
    `block_bytes`, capped so the grid has >= 2 steps (v7x megacore sharding)."""
    packing = max(8, 32 // itemsize)  # 8 rows f32, 16 bf16, 32 int8/fp8
    if rows <= packing:
        return rows  # single full-extent block (always legal)
    br = max(packing, (block_bytes // (_LANES * itemsize)) // packing * packing)
    # Ensure at least two grid steps so both TensorCores (v7x) issue DMAs.
    half = (-(-rows // 2) + packing - 1) // packing * packing
    return min(br, half)


# ----------------------------------------------------------------------------
# Pallas wrappers
# ----------------------------------------------------------------------------
def _identity_pallas(x: jax.Array) -> jax.Array:
    """Identity as a single HBM->HBM DMA; shape-agnostic, no VMEM staging."""
    nbytes = x.size * x.dtype.itemsize
    return pl.pallas_call(
        _identity_dma_kernel,
        out_shape=jax.ShapeDtypeStruct(x.shape, x.dtype),
        in_specs=[pl.BlockSpec(memory_space=pl.ANY)],
        out_specs=pl.BlockSpec(memory_space=pl.ANY),
        scratch_shapes=[pltpu.SemaphoreType.DMA],
        cost_estimate=pl.CostEstimate(
            flops=0, transcendentals=0, bytes_accessed=2 * nbytes),
    )(x)


def _zeros_pallas_2d(rows: int, dtype) -> jax.Array:
    """Lane-dense streamed zero fill of a (rows, 128) buffer."""
    itemsize = jnp.dtype(dtype).itemsize
    cap = _vmem_capacity_bytes()
    # Output-only path: just 2 double-buffered output blocks in VMEM.
    target = min(_MAX_BLOCK_BYTES, max(1 << 20, (cap // 4) // 2))
    block_rows = _choose_block_rows(rows, itemsize, target)
    vmem_limit = 2 * block_rows * _LANES * itemsize + (8 << 20)  # + headroom
    return pl.pallas_call(
        _zero_fill_kernel,
        out_shape=jax.ShapeDtypeStruct((rows, _LANES), dtype),
        grid=(pl.cdiv(rows, block_rows),),
        in_specs=[],
        out_specs=pl.BlockSpec((block_rows, _LANES), lambda i: (i, 0)),
        compiler_params=pltpu.CompilerParams(
            dimension_semantics=("parallel",),
            vmem_limit_bytes=vmem_limit),
        cost_estimate=pl.CostEstimate(
            flops=0, transcendentals=0,
            bytes_accessed=rows * _LANES * itemsize),
    )()


def _zeros_pallas(x: jax.Array) -> jax.Array:
    """zeros_like(x) via the streaming fill kernel (prefix + tiny XLA tail)."""
    orig_shape, dtype = x.shape, x.dtype
    n = int(x.size)
    main = (n // _LANES) * _LANES
    if main == 0:
        # Fewer than 128 elements: a kernel launch is not worth it.
        return jnp.zeros(orig_shape, dtype)
    head = _zeros_pallas_2d(main // _LANES, dtype)
    if main == n:
        return head.reshape(orig_shape)
    # Ragged tail (< 128 elems): tiny concat instead of pad + output slice.
    tail = jnp.zeros((n - main,), dtype)
    return jnp.concatenate([head.reshape(-1), tail]).reshape(orig_shape)


def filter_layer_pallas(x: jax.Array, is_on: bool) -> jax.Array:
    """FilterLayer.forward implemented with Pallas TPU kernels."""
    if not isinstance(is_on, bool):
        raise TypeError('is_on must be Boolean')
    return _identity_pallas(x) if is_on else _zeros_pallas(x)


def filter_layer(x: jax.Array, is_on: bool, *, use_pallas: bool = False) -> jax.Array:
    """Recommended wrapper (perf review #1): since is_on is static module
    state, short-circuit at trace time — zero HBM traffic, and zeros_like
    fuses into the consumer.  Set use_pallas=True to route through the
    demonstration kernels."""
    if not isinstance(is_on, bool):
        raise TypeError('is_on must be Boolean')
    if use_pallas:
        return filter_layer_pallas(x, is_on)
    return x if is_on else jnp.zeros_like(x)


if __name__ == "__main__":
    key = jax.random.PRNGKey(0)
    # NCHW input, consistent with a conv-style pipeline.
    x = jax.random.normal(key, (2, 4, 16, 16), dtype=jnp.float32)

    # --- Pallas kernel paths ---
    y_on = jax.block_until_ready(filter_layer_pallas(x, True))
    assert y_on.shape == x.shape and y_on.dtype == x.dtype
    assert bool(jnp.allclose(y_on, x))

    y_off = jax.block_until_ready(filter_layer_pallas(x, False))
    assert y_off.shape == x.shape and y_off.dtype == x.dtype
    assert bool(jnp.allclose(y_off, jnp.zeros_like(x)))

    # Ragged-shape sanity (on-path: shape-agnostic DMA; off-path: prefix + tail).
    z = jax.random.normal(key, (3, 5, 7), dtype=jnp.float32)
    assert bool(jnp.allclose(jax.block_until_ready(filter_layer_pallas(z, True)), z))
    assert bool(jnp.allclose(jax.block_until_ready(filter_layer_pallas(z, False)),
                             jnp.zeros_like(z)))

    # --- Recommended zero-cost wrapper (perf review #1) ---
    assert filter_layer(x, True) is x
    assert bool(jnp.allclose(jax.block_until_ready(filter_layer(x, False)),
                             jnp.zeros_like(x)))

    print("KERNEL_OK")
</pallas_src>

<mosaic_0001>
module attributes {stable_mosaic.version = 11 : i64} {
  func.func @_identity_dma_kernel(%arg0: memref<2x4x16x16xf32, #tpu.memory_space<any>>, %arg1: memref<2x4x16x16xf32, #tpu.memory_space<any>>, %arg2: memref<!tpu.dma_semaphore, #tpu.memory_space<semaphore_mem>>) attributes {dimension_semantics = [], scalar_prefetch = 0 : i64, scratch_operands = 1 : i64, tpu.core_type = #tpu.core_type<tc>} {
    tpu.enqueue_dma source(%arg0 : memref<2x4x16x16xf32, #tpu.memory_space<any>>) target(%arg1 : memref<2x4x16x16xf32, #tpu.memory_space<any>>) target_semaphore(%arg2 : memref<!tpu.dma_semaphore, #tpu.memory_space<semaphore_mem>>)
    tpu.wait_dma2 semaphore(%arg2 : memref<!tpu.dma_semaphore, #tpu.memory_space<semaphore_mem>>) src(%arg0 : memref<2x4x16x16xf32, #tpu.memory_space<any>>) dst(%arg1 : memref<2x4x16x16xf32, #tpu.memory_space<any>>)
    return
  }
}

</mosaic_0001>

<llo_original>
// kernel: tpu_custom_call.1
$region0: #{tpu_custom_call.1}
  #allocation0 [shape = 'u32[]', space=smem, size = 0x4, offset = 0x4, fixed_abs, tag = 'smem constant byte address 0x4 - core index']
  #allocation1 [shape = 'u32[144,128]{1,0:T(1,128)}', space=vmem, size = 0x12000, scoped, tag = 'internal scratch']
  #allocation2 [shape = 's32[1]{0}', space=sflag, size = 0x4, scoped, tag = 'scratch operand']
  #allocation3 [shape = 's32[]', space=sflag, size = 0x4, offset = 0, fixed_abs, tag = 'sflag constant byte address 0x0 - dummy sync flag']
  #allocation4 [shape = 'u32[0]{0}', space=smem, size = 0, offset = 0, fixed_abs, tag = 'smem constant byte address 0x0 - null']
  %s0 = inlined_call_operand.hbm [shape: f32[2,4,16,16], index: 0, kind: input, shape index: {}]
  %s1 = inlined_call_operand.hbm [shape: f32[2,4,16,16], index: 1, kind: output, shape index: {}]
  %s2 = sld [smem:[#allocation0]]
  $region2: #{tpu_custom_call.1} parent=0
    _
  %s4 = ssub.s32 1, %s2
  %s5 = scalar_select 0, %s4, %s2
  %s7 = sshll.u32 1, 14
  %s8 = sxor.u32 4294967295, %s7
  %s11 = sshll.u32 3, 24
  %s12 = sxor.u32 4294967295, %s11
  %s13 = sand.u32 0, %s12
  %s15 = sor.u32 %s13, 0
  %18 = dma.general %s0, 2048, %s1, [#allocation2], [#allocation3], [#allocation4], %s15, 0
  %s19 = smul.u32 2, 4
  %s20 = smul.u32 %s19, 16
  %s21 = smul.u32 %s20, 1
  %s22 = sshll.u32 %s21, 4
  %23 = dma.done [#allocation2], %s22
  %24 = vsyncmov [#allocation2]
  %s25 = vpop.sfrf %24
  %p26 = scmp.eq.s32.totalorder %s25, 0
  %p27 = pneg %p26
  %29 = shalt.err (%p27)

</llo_original>
